<compile_context>
chip_gen: v7x
topology: tpu7x:2x2x1
jax: 0.10.0
libtpu: 0.0.40
codegen_flags: <defaults>
</compile_context>

<pallas_src>
import jax
import jax.numpy as jnp
from jax import lax
from jax.experimental import pallas as pl
from jax.experimental.pallas import tpu as pltpu


def _decoder_kernel(x_ref, w1_ref, b1_ref, w2_ref, b2_ref,
                    w3t_ref, b3_ref, w4t_ref, b4_ref,
                    node_ref, rec_ref):
    """One grid step: full Decoder forward for a single batch element.

    x_ref   (1, K, H)   cluster_mtx[b]
    w1 (K, K), b1 (K, 1)   upsampling Linear #1   (applied as W @ x)
    w2 (N, K), b2 (N, 1)   upsampling Linear #2   (applied as W @ g)
    w3t (H, H), b3 (1, H)  node_proj Linear #1    (weight pre-transposed)
    w4t (H, N), b4 (1, N)  node_proj Linear #2    (weight pre-transposed)
    node_ref (1, N, N)  node_repr[b]
    rec_ref  (1, N, N)  reconstruct[b]
    """
    x = x_ref[0]                                                    # (K, H)

    # upsampling applied to x^T, result transposed back:
    #   relu(x^T W1^T + b1)^T == relu(W1 @ x + b1[:, None])
    g = jnp.maximum(
        jnp.dot(w1_ref[...], x, preferred_element_type=jnp.float32)
        + b1_ref[...], 0.0)                                         # (K, H)
    node = (jnp.dot(w2_ref[...], g, preferred_element_type=jnp.float32)
            + b2_ref[...])                                          # (N, H)

    # node_proj: y = x @ W^T + b, with W^T pre-computed in the wrapper
    h = jnp.maximum(
        jnp.dot(node, w3t_ref[...], preferred_element_type=jnp.float32)
        + b3_ref[...], 0.0)                                         # (N, H)
    nr = (jnp.dot(h, w4t_ref[...], preferred_element_type=jnp.float32)
          + b4_ref[...])                                            # (N, N)

    # reconstruct = node_repr @ node_repr^T  (contraction on last dims)
    rec = lax.dot_general(nr, nr, (((1,), (1,)), ((), ())),
                          preferred_element_type=jnp.float32)       # (N, N)

    node_ref[0] = nr.astype(node_ref.dtype)
    rec_ref[0] = rec.astype(rec_ref.dtype)


def decoder_forward(cluster_mtx, params):
    """Pallas forward of the Decoder module.

    cluster_mtx: (B, K, H) float32
    params: dict with
        w1 (K, K), b1 (K,)   -- upsampling[0]
        w2 (N, K), b2 (N,)   -- upsampling[2]
        w3 (H, H), b3 (H,)   -- node_proj[0]
        w4 (N, H), b4 (N,)   -- node_proj[2]
    returns (node_repr (B, N, N), reconstruct (B, N, N))
    """
    B, K, H = cluster_mtx.shape
    w1, b1 = params["w1"], params["b1"]
    w2, b2 = params["w2"], params["b2"]
    w3, b3 = params["w3"], params["b3"]
    w4, b4 = params["w4"], params["b4"]
    N = w2.shape[0]
    assert w1.shape == (K, K) and w2.shape == (N, K)
    assert w3.shape == (H, H) and w4.shape == (N, H)

    # Layout plumbing done once in the wrapper (XLA), not per grid step:
    #  - biases as column/row vectors so in-kernel adds are pure broadcasts
    #  - node_proj weights pre-transposed so the kernel never transposes
    b1c = b1.reshape(K, 1).astype(jnp.float32)
    b2c = b2.reshape(N, 1).astype(jnp.float32)
    b3r = b3.reshape(1, H).astype(jnp.float32)
    b4r = b4.reshape(1, N).astype(jnp.float32)
    w3t = w3.T.astype(jnp.float32)            # (H, H)
    w4t = w4.T.astype(jnp.float32)            # (H, N)

    def resident(shape):                      # full block, constant index map
        return pl.BlockSpec(shape, lambda b: (0, 0))

    node_repr, reconstruct = pl.pallas_call(
        _decoder_kernel,
        out_shape=(
            jax.ShapeDtypeStruct((B, N, N), jnp.float32),
            jax.ShapeDtypeStruct((B, N, N), jnp.float32),
        ),
        grid_spec=pltpu.PrefetchScalarGridSpec(
            num_scalar_prefetch=0,
            grid=(B,),
            in_specs=[
                pl.BlockSpec((1, K, H), lambda b: (b, 0, 0)),   # cluster_mtx[b]
                resident((K, K)), resident((K, 1)),             # w1, b1
                resident((N, K)), resident((N, 1)),             # w2, b2
                resident((H, H)), resident((1, H)),             # w3^T, b3
                resident((H, N)), resident((1, N)),             # w4^T, b4
            ],
            out_specs=(
                pl.BlockSpec((1, N, N), lambda b: (b, 0, 0)),   # node_repr[b]
                pl.BlockSpec((1, N, N), lambda b: (b, 0, 0)),   # reconstruct[b]
            ),
        ),
        compiler_params=pltpu.CompilerParams(
            dimension_semantics=("parallel",)),   # no accumulators -> v7x 2-TC
    )(cluster_mtx, w1, b1c, w2, b2c, w3t, b3r, w4t, b4r)
    return node_repr, reconstruct


def _reference(cluster_mtx, params):
    """Pure-JAX mirror of the torch forward (for verification)."""
    w1, b1 = params["w1"], params["b1"]
    w2, b2 = params["w2"], params["b2"]
    w3, b3 = params["w3"], params["b3"]
    w4, b4 = params["w4"], params["b4"]
    xT = jnp.transpose(cluster_mtx, (0, 2, 1))          # (B, H, K)
    h1 = jax.nn.relu(xT @ w1.T + b1)                    # (B, H, K)
    u = h1 @ w2.T + b2                                  # (B, H, N)
    node = jnp.transpose(u, (0, 2, 1))                  # (B, N, H)
    h2 = jax.nn.relu(node @ w3.T + b3)                  # (B, N, H)
    nr = h2 @ w4.T + b4                                 # (B, N, N)
    rec = jnp.einsum("bij,bkj->bik", nr, nr)            # (B, N, N)
    return nr, rec


if __name__ == "__main__":
    B = 2
    cluster_number = 8    # K
    hidden_dim = 32       # H
    in_dim = 16           # N (number of nodes / output width)

    key = jax.random.PRNGKey(0)
    ks = jax.random.split(key, 9)

    def linear_init(kw, kb, out_d, in_d):
        # matches nn.Linear default U(-1/sqrt(in), 1/sqrt(in)), deterministic
        bound = float(in_d) ** -0.5
        w = jax.random.uniform(kw, (out_d, in_d), jnp.float32, -bound, bound)
        b = jax.random.uniform(kb, (out_d,), jnp.float32, -bound, bound)
        return w, b

    w1, b1 = linear_init(ks[1], ks[2], cluster_number, cluster_number)
    w2, b2 = linear_init(ks[3], ks[4], in_dim, cluster_number)
    w3, b3 = linear_init(ks[5], ks[6], hidden_dim, hidden_dim)
    w4, b4 = linear_init(ks[7], ks[8], in_dim, hidden_dim)
    params = dict(w1=w1, b1=b1, w2=w2, b2=b2, w3=w3, b3=b3, w4=w4, b4=b4)

    cluster_mtx = jax.random.normal(
        ks[0], (B, cluster_number, hidden_dim), jnp.float32)

    node_repr, reconstruct = jax.block_until_ready(
        decoder_forward(cluster_mtx, params))

    ref_node, ref_rec = _reference(cluster_mtx, params)
    assert node_repr.shape == (B, in_dim, in_dim)
    assert reconstruct.shape == (B, in_dim, in_dim)
    assert jnp.allclose(node_repr, ref_node, atol=1e-4, rtol=1e-4)
    assert jnp.allclose(reconstruct, ref_rec, atol=1e-4, rtol=1e-4)

    print("KERNEL_OK")
</pallas_src>

<mosaic_0001>
module attributes {stable_mosaic.version = 11 : i64} {
  func.func @_decoder_kernel(%arg0: i32, %arg1: memref<1x8x32xf32, #tpu.memory_space<vmem>>, %arg2: memref<8x8xf32, #tpu.memory_space<vmem>>, %arg3: memref<8x1xf32, #tpu.memory_space<vmem>>, %arg4: memref<16x8xf32, #tpu.memory_space<vmem>>, %arg5: memref<16x1xf32, #tpu.memory_space<vmem>>, %arg6: memref<32x32xf32, #tpu.memory_space<vmem>>, %arg7: memref<1x32xf32, #tpu.memory_space<vmem>>, %arg8: memref<32x16xf32, #tpu.memory_space<vmem>>, %arg9: memref<1x16xf32, #tpu.memory_space<vmem>>, %arg10: memref<1x16x16xf32, #tpu.memory_space<vmem>>, %arg11: memref<1x16x16xf32, #tpu.memory_space<vmem>>) attributes {dimension_semantics = [#tpu.dimension_semantics<parallel>], iteration_bounds = array<i64: 2>, scalar_prefetch = 0 : i64, scratch_operands = 0 : i64, tpu.core_type = #tpu.core_type<tc>, window_params = [{transform_indices = @transform_0, window_bounds = array<i64: 1, 8, 32>}, {pipeline_mode = #tpu.pipeline_mode<synchronous>, transform_indices = @transform_1, window_bounds = array<i64: 8, 8>}, {pipeline_mode = #tpu.pipeline_mode<synchronous>, transform_indices = @transform_2, window_bounds = array<i64: 8, 1>}, {pipeline_mode = #tpu.pipeline_mode<synchronous>, transform_indices = @transform_3, window_bounds = array<i64: 16, 8>}, {pipeline_mode = #tpu.pipeline_mode<synchronous>, transform_indices = @transform_4, window_bounds = array<i64: 16, 1>}, {pipeline_mode = #tpu.pipeline_mode<synchronous>, transform_indices = @transform_5, window_bounds = array<i64: 32, 32>}, {pipeline_mode = #tpu.pipeline_mode<synchronous>, transform_indices = @transform_6, window_bounds = array<i64: 1, 32>}, {pipeline_mode = #tpu.pipeline_mode<synchronous>, transform_indices = @transform_7, window_bounds = array<i64: 32, 16>}, {pipeline_mode = #tpu.pipeline_mode<synchronous>, transform_indices = @transform_8, window_bounds = array<i64: 1, 16>}, {transform_indices = @transform_9, window_bounds = array<i64: 1, 16, 16>}, {transform_indices = @transform_10, window_bounds = array<i64: 1, 16, 16>}]} {
    %c0 = arith.constant 0 : index
    %c0_0 = arith.constant 0 : index
    %c0_1 = arith.constant 0 : index
    %0 = vector.load %arg1[%c0, %c0_0, %c0_1] : memref<1x8x32xf32, #tpu.memory_space<vmem>>, vector<1x8x32xf32>
    %1 = vector.shape_cast %0 : vector<1x8x32xf32> to vector<8x32xf32>
    %c0_2 = arith.constant 0 : index
    %c0_3 = arith.constant 0 : index
    %2 = vector.load %arg2[%c0_2, %c0_3] : memref<8x8xf32, #tpu.memory_space<vmem>>, vector<8x8xf32>
    %cst = arith.constant dense<0.000000e+00> : vector<8x32xf32>
    %3 = tpu.matmul %2, %1, %cst {dimension_numbers = #tpu.dot_dimension_numbers<[1], [0], [0], [1], [0, 0, 1, 1], [], []>} : vector<8x8xf32>, vector<8x32xf32>, vector<8x32xf32> -> vector<8x32xf32>
    %c0_4 = arith.constant 0 : index
    %c0_5 = arith.constant 0 : index
    %4 = vector.load %arg3[%c0_4, %c0_5] : memref<8x1xf32, #tpu.memory_space<vmem>>, vector<8x1xf32>
    %5 = vector.broadcast %4 : vector<8x1xf32> to vector<8x32xf32>
    %6 = arith.addf %3, %5 : vector<8x32xf32>
    %cst_6 = arith.constant 0.000000e+00 : f32
    %7 = vector.broadcast %cst_6 : f32 to vector<8x32xf32>
    %8 = arith.maximumf %6, %7 : vector<8x32xf32>
    %c0_7 = arith.constant 0 : index
    %c0_8 = arith.constant 0 : index
    %9 = vector.load %arg4[%c0_7, %c0_8] : memref<16x8xf32, #tpu.memory_space<vmem>>, vector<16x8xf32>
    %cst_9 = arith.constant dense<0.000000e+00> : vector<16x32xf32>
    %10 = tpu.matmul %9, %8, %cst_9 {dimension_numbers = #tpu.dot_dimension_numbers<[1], [0], [0], [1], [0, 0, 1, 1], [], []>} : vector<16x8xf32>, vector<8x32xf32>, vector<16x32xf32> -> vector<16x32xf32>
    %c0_10 = arith.constant 0 : index
    %c0_11 = arith.constant 0 : index
    %11 = vector.load %arg5[%c0_10, %c0_11] : memref<16x1xf32, #tpu.memory_space<vmem>>, vector<16x1xf32>
    %12 = vector.broadcast %11 : vector<16x1xf32> to vector<16x32xf32>
    %13 = arith.addf %10, %12 : vector<16x32xf32>
    %c0_12 = arith.constant 0 : index
    %c0_13 = arith.constant 0 : index
    %14 = vector.load %arg6[%c0_12, %c0_13] : memref<32x32xf32, #tpu.memory_space<vmem>>, vector<32x32xf32>
    %cst_14 = arith.constant dense<0.000000e+00> : vector<16x32xf32>
    %15 = tpu.matmul %13, %14, %cst_14 {dimension_numbers = #tpu.dot_dimension_numbers<[1], [0], [0], [1], [0, 0, 1, 1], [], []>} : vector<16x32xf32>, vector<32x32xf32>, vector<16x32xf32> -> vector<16x32xf32>
    %c0_15 = arith.constant 0 : index
    %c0_16 = arith.constant 0 : index
    %16 = vector.load %arg7[%c0_15, %c0_16] : memref<1x32xf32, #tpu.memory_space<vmem>>, vector<1x32xf32>
    %17 = vector.broadcast %16 : vector<1x32xf32> to vector<16x32xf32>
    %18 = arith.addf %15, %17 : vector<16x32xf32>
    %cst_17 = arith.constant 0.000000e+00 : f32
    %19 = vector.broadcast %cst_17 : f32 to vector<16x32xf32>
    %20 = arith.maximumf %18, %19 : vector<16x32xf32>
    %c0_18 = arith.constant 0 : index
    %c0_19 = arith.constant 0 : index
    %21 = vector.load %arg8[%c0_18, %c0_19] : memref<32x16xf32, #tpu.memory_space<vmem>>, vector<32x16xf32>
    %cst_20 = arith.constant dense<0.000000e+00> : vector<16x16xf32>
    %22 = tpu.matmul %20, %21, %cst_20 {dimension_numbers = #tpu.dot_dimension_numbers<[1], [0], [0], [1], [0, 0, 1, 1], [], []>} : vector<16x32xf32>, vector<32x16xf32>, vector<16x16xf32> -> vector<16x16xf32>
    %c0_21 = arith.constant 0 : index
    %c0_22 = arith.constant 0 : index
    %23 = vector.load %arg9[%c0_21, %c0_22] : memref<1x16xf32, #tpu.memory_space<vmem>>, vector<1x16xf32>
    %24 = vector.broadcast %23 : vector<1x16xf32> to vector<16x16xf32>
    %25 = arith.addf %22, %24 : vector<16x16xf32>
    %cst_23 = arith.constant dense<0.000000e+00> : vector<16x16xf32>
    %26 = tpu.matmul %25, %25, %cst_23 {dimension_numbers = #tpu.dot_dimension_numbers<[1], [1], [0], [0], [0, 0, 1, 0], [], []>} : vector<16x16xf32>, vector<16x16xf32>, vector<16x16xf32> -> vector<16x16xf32>
    %c0_24 = arith.constant 0 : index
    %c0_25 = arith.constant 0 : index
    %c0_26 = arith.constant 0 : index
    %27 = vector.load %arg10[%c0_24, %c0_25, %c0_26] : memref<1x16x16xf32, #tpu.memory_space<vmem>>, vector<1x16x16xf32>
    %28 = vector.shape_cast %27 : vector<1x16x16xf32> to vector<16x16xf32>
    %29 = vector.shape_cast %25 : vector<16x16xf32> to vector<1x16x16xf32>
    tpu.vector_store %arg10[%c0_24, %c0_25, %c0_26], %29 {strides = array<i32>} : memref<1x16x16xf32, #tpu.memory_space<vmem>>, vector<1x16x16xf32>,
    %c0_27 = arith.constant 0 : index
    %c0_28 = arith.constant 0 : index
    %c0_29 = arith.constant 0 : index
    %30 = vector.load %arg11[%c0_27, %c0_28, %c0_29] : memref<1x16x16xf32, #tpu.memory_space<vmem>>, vector<1x16x16xf32>
    %31 = vector.shape_cast %30 : vector<1x16x16xf32> to vector<16x16xf32>
    %32 = vector.shape_cast %26 : vector<16x16xf32> to vector<1x16x16xf32>
    tpu.vector_store %arg11[%c0_27, %c0_28, %c0_29], %32 {strides = array<i32>} : memref<1x16x16xf32, #tpu.memory_space<vmem>>, vector<1x16x16xf32>,
    return
  }
  func.func @transform_0(%arg0: i32) -> (i32, i32, i32) {
    %c0_i32 = arith.constant 0 : i32
    %c0_i32_0 = arith.constant 0 : i32
    %c0_i32_1 = arith.constant 0 : i32
    return %arg0, %c0_i32, %c0_i32_0 : i32, i32, i32
  }
  func.func @transform_1(%arg0: i32) -> (i32, i32) {
    %c0_i32 = arith.constant 0 : i32
    %c0_i32_0 = arith.constant 0 : i32
    %c0_i32_1 = arith.constant 0 : i32
    return %c0_i32, %c0_i32_0 : i32, i32
  }
  func.func @transform_2(%arg0: i32) -> (i32, i32) {
    %c0_i32 = arith.constant 0 : i32
    %c0_i32_0 = arith.constant 0 : i32
    %c0_i32_1 = arith.constant 0 : i32
    return %c0_i32, %c0_i32_0 : i32, i32
  }
  func.func @transform_3(%arg0: i32) -> (i32, i32) {
    %c0_i32 = arith.constant 0 : i32
    %c0_i32_0 = arith.constant 0 : i32
    %c0_i32_1 = arith.constant 0 : i32
    return %c0_i32, %c0_i32_0 : i32, i32
  }
  func.func @transform_4(%arg0: i32) -> (i32, i32) {
    %c0_i32 = arith.constant 0 : i32
    %c0_i32_0 = arith.constant 0 : i32
    %c0_i32_1 = arith.constant 0 : i32
    return %c0_i32, %c0_i32_0 : i32, i32
  }
  func.func @transform_5(%arg0: i32) -> (i32, i32) {
    %c0_i32 = arith.constant 0 : i32
    %c0_i32_0 = arith.constant 0 : i32
    %c0_i32_1 = arith.constant 0 : i32
    return %c0_i32, %c0_i32_0 : i32, i32
  }
  func.func @transform_6(%arg0: i32) -> (i32, i32) {
    %c0_i32 = arith.constant 0 : i32
    %c0_i32_0 = arith.constant 0 : i32
    %c0_i32_1 = arith.constant 0 : i32
    return %c0_i32, %c0_i32_0 : i32, i32
  }
  func.func @transform_7(%arg0: i32) -> (i32, i32) {
    %c0_i32 = arith.constant 0 : i32
    %c0_i32_0 = arith.constant 0 : i32
    %c0_i32_1 = arith.constant 0 : i32
    return %c0_i32, %c0_i32_0 : i32, i32
  }
  func.func @transform_8(%arg0: i32) -> (i32, i32) {
    %c0_i32 = arith.constant 0 : i32
    %c0_i32_0 = arith.constant 0 : i32
    %c0_i32_1 = arith.constant 0 : i32
    return %c0_i32, %c0_i32_0 : i32, i32
  }
  func.func @transform_9(%arg0: i32) -> (i32, i32, i32) {
    %c0_i32 = arith.constant 0 : i32
    %c0_i32_0 = arith.constant 0 : i32
    %c0_i32_1 = arith.constant 0 : i32
    return %arg0, %c0_i32, %c0_i32_0 : i32, i32, i32
  }
  func.func @transform_10(%arg0: i32) -> (i32, i32, i32) {
    %c0_i32 = arith.constant 0 : i32
    %c0_i32_0 = arith.constant 0 : i32
    %c0_i32_1 = arith.constant 0 : i32
    return %arg0, %c0_i32, %c0_i32_0 : i32, i32, i32
  }
}

</mosaic_0001>

<llo_original>
// kernel: tpu_custom_call.1
$region0: #{tpu_custom_call.1}
  #allocation0 [shape = 'u32[]', space=smem, size = 0x4, offset = 0x4, fixed_abs, tag = 'smem constant byte address 0x4 - core index']
  #allocation1 [shape = 'u32[144,128]{1,0:T(1,128)}', space=vmem, size = 0x12000, scoped, tag = 'internal scratch']
  %s0 = inlined_call_operand.vmem [shape: f32[2,8,32], index: 0, kind: input, shape index: {}]
  %s1 = inlined_call_operand.vmem [shape: f32[8,8], index: 1, kind: input, shape index: {}]
  %s2 = inlined_call_operand.vmem [shape: f32[8,1], index: 2, kind: input, shape index: {}]
  %s3 = inlined_call_operand.vmem [shape: f32[16,8], index: 3, kind: input, shape index: {}]
  %s4 = inlined_call_operand.vmem [shape: f32[16,1], index: 4, kind: input, shape index: {}]
  %s5 = inlined_call_operand.vmem [shape: f32[32,32], index: 5, kind: input, shape index: {}]
  %s6 = inlined_call_operand.vmem [shape: f32[1,32], index: 6, kind: input, shape index: {}]
  %s7 = inlined_call_operand.vmem [shape: f32[32,16], index: 7, kind: input, shape index: {}]
  %s8 = inlined_call_operand.vmem [shape: f32[1,16], index: 8, kind: input, shape index: {}]
  %s9 = inlined_call_operand.hbm [shape: f32[2,16,16], index: 9, kind: output, shape index: {0}]
  %s10 = inlined_call_operand.hbm [shape: f32[2,16,16], index: 10, kind: output, shape index: {1}]
  %11 = xla_tuple %s9, %s10
  %s12 = sld [smem:[#allocation0]]
  $region77: #{tpu_custom_call.1} parent=0
    _
  %s14 = ssub.s32 1, %s12
  %s15 = scalar_select 0, %s14, %s12
  $region1: #{tpu_custom_call.1} parent=0
    #allocation2 [shape = 'u8[16384]{0}', space=vmem, size = 0x4000, scoped, tag = 'output window, operand 0']
    #allocation3 [shape = 's32[2]{0}', space=sflag, size = 0x8, scoped, tag = 'scoped memory for tpu_custom_call.1']
    #allocation4 [shape = 'u8[16384]{0}', space=vmem, size = 0x4000, scoped, tag = 'output window, operand 1']
    #allocation5 [shape = 's32[2]{0}', space=sflag, size = 0x8, scoped, tag = 'scoped memory for tpu_custom_call.1']
    %16 = vsyncpa [#allocation3], 0
    %s17 = scalar_lea.sflag [#allocation3], 1
    %18 = vsyncpa %s17, 0
    %19 = vsyncpa [#allocation5], 0
    %s20 = scalar_lea.sflag [#allocation5], 1
    %21 = vsyncpa %s20, 0
    loop: start=0, step=1, limit=4
    $region2: #{tpu_custom_call.1} parent=1 // loop_pre_header
      _
    $region3: #{tpu_custom_call.1} parent=1 // loop_header
      %s23 = sphi 0, %s27
      %p24 = scmp.ge.s32.totalorder %s23, 4
      %s33 = sphi 0, %s35
      %s36 = sphi 0, %s33
      %s37 = sphi 0, %s36
      %s53 = sphi 0, %s37
      %s57 = sphi 0, %s57
      %s59 = sphi 0, %s57
      %s60 = sphi 0, %s59
      %s74 = sphi 0, %s60
      %s78 = sphi 0, %s78
      %s80 = sphi 0, %s78
      %s81 = sphi 0, %s80
      %s95 = sphi 0, %s81
      %s99 = sphi 0, %s99
      %s101 = sphi 0, %s99
      %s102 = sphi 0, %s101
      %s116 = sphi 0, %s102
      %s120 = sphi 0, %s120
      %s122 = sphi 0, %s120
      %s123 = sphi 0, %s122
      %s137 = sphi 0, %s123
      %s141 = sphi 0, %s141
      %s143 = sphi 0, %s141
      %s144 = sphi 0, %s143
      %s158 = sphi 0, %s144
      %s162 = sphi 0, %s162
      %s164 = sphi 0, %s162
      %s165 = sphi 0, %s164
      %s179 = sphi 0, %s165
      %s183 = sphi 0, %s183
      %s185 = sphi 0, %s183
      %s186 = sphi 0, %s185
      %s200 = sphi 0, %s186
      %s204 = sphi 0, %s204
      %s206 = sphi 0, %s204
      %s207 = sphi 0, %s206
      %s221 = sphi 0, %s207
      %s227 = sphi 0, %s229
      %s230 = sphi 0, %s227
      %s231 = sphi 0, %s230
      %s247 = sphi 0, %s231
      %s253 = sphi 0, %s255
      %s256 = sphi 0, %s253
      %s257 = sphi 0, %s256
      %s273 = sphi 0, %s257
    $region4: #{tpu_custom_call.1} parent=1 // loop_header_branch
      %26 = sbr.rel (%p24) target = $region8
    $region5: #{tpu_custom_call.1} parent=1 // loop_body
      %s28 = ssub.s32 %s23, 1
      %s29 = ssub.s32 %s23, 2
      %s30 = sadd.s32 %s23, 1
      %s31 = ssub.s32 %s23, %s30
      %p32 = scmp.eq.s32.totalorder %s31, 0
      %s34 = sadd.s32 %s33, 1
      %s35 = scalar_select %p32, %s33, %s34
      %p38 = pneg %p32
      %p39 = scmp.eq.s32.totalorder %s23, 1
      %p40 = por %p38, %p39
      %p41 = scmp.ne.s32.totalorder %s33, %s36
      %p42 = scmp.eq.s32.totalorder %s23, 0
      %p43 = por %p41, %p42
      %p44 = scmp.ne.s32.totalorder %s33, %s36
      %p45 = scmp.eq.s32.totalorder %s28, 1
      %p46 = por %p44, %p45
      %p47 = scmp.ne.s32.totalorder %s36, %s37
      %p48 = scmp.eq.s32.totalorder %s28, 0
      %p49 = por %p47, %p48
      %p50 = scmp.ne.s32.totalorder %s36, %s37
      %p51 = scmp.eq.s32.totalorder %s29, 1
      %p52 = por %p50, %p51
      %p54 = scmp.ne.s32.totalorder %s37, %s53
      %p55 = scmp.eq.s32.totalorder %s29, 0
      %p56 = por %p54, %p55
      %s58 = sadd.s32 %s57, 1
      %p61 = scmp.eq.s32.totalorder %s23, 1
      %p62 = scmp.ne.s32.totalorder %s57, %s59
      %p63 = scmp.eq.s32.totalorder %s23, 0
      %p64 = por %p62, %p63
      %p65 = scmp.ne.s32.totalorder %s57, %s59
      %p66 = scmp.eq.s32.totalorder %s28, 1
      %p67 = por %p65, %p66
      %p68 = scmp.ne.s32.totalorder %s59, %s60
      %p69 = scmp.eq.s32.totalorder %s28, 0
      %p70 = por %p68, %p69
      %p71 = scmp.ne.s32.totalorder %s59, %s60
      %p72 = scmp.eq.s32.totalorder %s29, 1
      %p73 = por %p71, %p72
      %p75 = scmp.ne.s32.totalorder %s60, %s74
      %p76 = scmp.eq.s32.totalorder %s29, 0
      %p77 = por %p75, %p76
      %s79 = sadd.s32 %s78, 1
      %p82 = scmp.eq.s32.totalorder %s23, 1
      %p83 = scmp.ne.s32.totalorder %s78, %s80
      %p84 = scmp.eq.s32.totalorder %s23, 0
      %p85 = por %p83, %p84
      %p86 = scmp.ne.s32.totalorder %s78, %s80
      %p87 = scmp.eq.s32.totalorder %s28, 1
      %p88 = por %p86, %p87
      %p89 = scmp.ne.s32.totalorder %s80, %s81
      %p90 = scmp.eq.s32.totalorder %s28, 0
      %p91 = por %p89, %p90
      %p92 = scmp.ne.s32.totalorder %s80, %s81
      %p93 = scmp.eq.s32.totalorder %s29, 1
      %p94 = por %p92, %p93
      %p96 = scmp.ne.s32.totalorder %s81, %s95
      %p97 = scmp.eq.s32.totalorder %s29, 0
      %p98 = por %p96, %p97
      %s100 = sadd.s32 %s99, 1
      %p103 = scmp.eq.s32.totalorder %s23, 1
      %p104 = scmp.ne.s32.totalorder %s99, %s101
      %p105 = scmp.eq.s32.totalorder %s23, 0
      %p106 = por %p104, %p105
      %p107 = scmp.ne.s32.totalorder %s99, %s101
      %p108 = scmp.eq.s32.totalorder %s28, 1
      %p109 = por %p107, %p108
      %p110 = scmp.ne.s32.totalorder %s101, %s102
      %p111 = scmp.eq.s32.totalorder %s28, 0
      %p112 = por %p110, %p111
      %p113 = scmp.ne.s32.totalorder %s101, %s102
      %p114 = scmp.eq.s32.totalorder %s29, 1
      %p115 = por %p113, %p114
      %p117 = scmp.ne.s32.totalorder %s102, %s116
      %p118 = scmp.eq.s32.totalorder %s29, 0
      %p119 = por %p117, %p118
      %s121 = sadd.s32 %s120, 1
      %p124 = scmp.eq.s32.totalorder %s23, 1
      %p125 = scmp.ne.s32.totalorder %s120, %s122
      %p126 = scmp.eq.s32.totalorder %s23, 0
      %p127 = por %p125, %p126
      %p128 = scmp.ne.s32.totalorder %s120, %s122
      %p129 = scmp.eq.s32.totalorder %s28, 1
      %p130 = por %p128, %p129
      %p131 = scmp.ne.s32.totalorder %s122, %s123
      %p132 = scmp.eq.s32.totalorder %s28, 0
      %p133 = por %p131, %p132
      %p134 = scmp.ne.s32.totalorder %s122, %s123
      %p135 = scmp.eq.s32.totalorder %s29, 1
      %p136 = por %p134, %p135
      %p138 = scmp.ne.s32.totalorder %s123, %s137
      %p139 = scmp.eq.s32.totalorder %s29, 0
      %p140 = por %p138, %p139
      %s142 = sadd.s32 %s141, 1
      %p145 = scmp.eq.s32.totalorder %s23, 1
      %p146 = scmp.ne.s32.totalorder %s141, %s143
      %p147 = scmp.eq.s32.totalorder %s23, 0
      %p148 = por %p146, %p147
      %p149 = scmp.ne.s32.totalorder %s141, %s143
      %p150 = scmp.eq.s32.totalorder %s28, 1
      %p151 = por %p149, %p150
      %p152 = scmp.ne.s32.totalorder %s143, %s144
      %p153 = scmp.eq.s32.totalorder %s28, 0
      %p154 = por %p152, %p153
      %p155 = scmp.ne.s32.totalorder %s143, %s144
      %p156 = scmp.eq.s32.totalorder %s29, 1
      %p157 = por %p155, %p156
      %p159 = scmp.ne.s32.totalorder %s144, %s158
      %p160 = scmp.eq.s32.totalorder %s29, 0
      %p161 = por %p159, %p160
      %s163 = sadd.s32 %s162, 1
      %p166 = scmp.eq.s32.totalorder %s23, 1
      %p167 = scmp.ne.s32.totalorder %s162, %s164
      %p168 = scmp.eq.s32.totalorder %s23, 0
      %p169 = por %p167, %p168
      %p170 = scmp.ne.s32.totalorder %s162, %s164
      %p171 = scmp.eq.s32.totalorder %s28, 1
      %p172 = por %p170, %p171
      %p173 = scmp.ne.s32.totalorder %s164, %s165
      %p174 = scmp.eq.s32.totalorder %s28, 0
      %p175 = por %p173, %p174
      %p176 = scmp.ne.s32.totalorder %s164, %s165
      %p177 = scmp.eq.s32.totalorder %s29, 1
      %p178 = por %p176, %p177
      %p180 = scmp.ne.s32.totalorder %s165, %s179
      %p181 = scmp.eq.s32.totalorder %s29, 0
      %p182 = por %p180, %p181
      %s184 = sadd.s32 %s183, 1
      %p187 = scmp.eq.s32.totalorder %s23, 1
      %p188 = scmp.ne.s32.totalorder %s183, %s185
      %p189 = scmp.eq.s32.totalorder %s23, 0
      %p190 = por %p188, %p189
      %p191 = scmp.ne.s32.totalorder %s183, %s185
      %p192 = scmp.eq.s32.totalorder %s28, 1
      %p193 = por %p191, %p192
      %p194 = scmp.ne.s32.totalorder %s185, %s186
      %p195 = scmp.eq.s32.totalorder %s28, 0
      %p196 = por %p194, %p195
      %p197 = scmp.ne.s32.totalorder %s185, %s186
      %p198 = scmp.eq.s32.totalorder %s29, 1
      %p199 = por %p197, %p198
      %p201 = scmp.ne.s32.totalorder %s186, %s200
      %p202 = scmp.eq.s32.totalorder %s29, 0
      %p203 = por %p201, %p202
      %s205 = sadd.s32 %s204, 1
      %p208 = scmp.eq.s32.totalorder %s23, 1
      %p209 = scmp.ne.s32.totalorder %s204, %s206
      %p210 = scmp.eq.s32.totalorder %s23, 0
      %p211 = por %p209, %p210
      %p212 = scmp.ne.s32.totalorder %s204, %s206
      %p213 = scmp.eq.s32.totalorder %s28, 1
      %p214 = por %p212, %p213
      %p215 = scmp.ne.s32.totalorder %s206, %s207
      %p216 = scmp.eq.s32.totalorder %s28, 0
      %p217 = por %p215, %p216
      %p218 = scmp.ne.s32.totalorder %s206, %s207
      %p219 = scmp.eq.s32.totalorder %s29, 1
      %p220 = por %p218, %p219
      %p222 = scmp.ne.s32.totalorder %s207, %s221
      %p223 = scmp.eq.s32.totalorder %s29, 0
      %p224 = por %p222, %p223
      %s225 = ssub.s32 %s23, %s30
      %p226 = scmp.eq.s32.totalorder %s225, 0
      %s228 = sadd.s32 %s227, 1
      %s229 = scalar_select %p226, %s227, %s228
      %p232 = pneg %p226
      %p233 = scmp.eq.s32.totalorder %s23, 1
      %p234 = por %p232, %p233
      %p235 = scmp.ne.s32.totalorder %s227, %s230
      %p236 = scmp.eq.s32.totalorder %s23, 0
      %p237 = por %p235, %p236
      %p238 = scmp.ne.s32.totalorder %s227, %s230
      %p239 = scmp.eq.s32.totalorder %s28, 1
      %p240 = por %p238, %p239
      %p241 = scmp.ne.s32.totalorder %s230, %s231
      %p242 = scmp.eq.s32.totalorder %s28, 0
      %p243 = por %p241, %p242
      %p244 = scmp.ne.s32.totalorder %s230, %s231
      %p245 = scmp.eq.s32.totalorder %s29, 1
      %p246 = por %p244, %p245
      %p248 = scmp.ne.s32.totalorder %s231, %s247
      %p249 = scmp.eq.s32.totalorder %s29, 0
      %p250 = por %p248, %p249
      %s251 = ssub.s32 %s23, %s30
      %p252 = scmp.eq.s32.totalorder %s251, 0
      %s254 = sadd.s32 %s253, 1
      %s255 = scalar_select %p252, %s253, %s254
      %p258 = pneg %p252
      %p259 = scmp.eq.s32.totalorder %s23, 1
      %p260 = por %p258, %p259
      %p261 = scmp.ne.s32.totalorder %s253, %s256
      %p262 = scmp.eq.s32.totalorder %s23, 0
      %p263 = por %p261, %p262
      %p264 = scmp.ne.s32.totalorder %s253, %s256
      %p265 = scmp.eq.s32.totalorder %s28, 1
      %p266 = por %p264, %p265
      %p267 = scmp.ne.s32.totalorder %s256, %s257
      %p268 = scmp.eq.s32.totalorder %s28, 0
      %p269 = por %p267, %p268
      %p270 = scmp.ne.s32.totalorder %s256, %s257
      %p271 = scmp.eq.s32.totalorder %s29, 1
      %p272 = por %p270, %p271
      %p274 = scmp.ne.s32.totalorder %s257, %s273
      %p275 = scmp.eq.s32.totalorder %s29, 0
      %p276 = por %p274, %p275
      %p277 = scmp.le.s32.totalorder 1, %s23
      %p278 = scmp.lt.s32.totalorder %s23, 3
      %p279 = pnand %p277, %p278
      %p280 = pneg %p279
      // Predicated region
      $region9: #{tpu_custom_call.1} parent=5 // pred_check
        _
      $region10: #{tpu_custom_call.1} parent=5 // pred_check_branch
        %282 = sbr.rel (%p279) target = $region12
      $region11: #{tpu_custom_call.1} parent=5 // pred_region
        %s283 = ssub.s32 %s23, 1
        // Predicated region
        $region13: #{tpu_custom_call.1} parent=11 // pred_check
          %p284 = pneg %p70
        $region14: #{tpu_custom_call.1} parent=11 // pred_check_branch
          %286 = sbr.rel (%p284) target = $region16
        $region15: #{tpu_custom_call.1} parent=11 // pred_region
          _
        $region16: #{tpu_custom_call.1} parent=11 // pred_fallthru
          _
        // Predicated region
        $region17: #{tpu_custom_call.1} parent=11 // pred_check
          %p287 = pneg %p91
        $region18: #{tpu_custom_call.1} parent=11 // pred_check_branch
          %289 = sbr.rel (%p287) target = $region20
        $region19: #{tpu_custom_call.1} parent=11 // pred_region
          _
        $region20: #{tpu_custom_call.1} parent=11 // pred_fallthru
          _
        // Predicated region
        $region21: #{tpu_custom_call.1} parent=11 // pred_check
          %p290 = pneg %p112
        $region22: #{tpu_custom_call.1} parent=11 // pred_check_branch
          %292 = sbr.rel (%p290) target = $region24
        $region23: #{tpu_custom_call.1} parent=11 // pred_region
          _
        $region24: #{tpu_custom_call.1} parent=11 // pred_fallthru
          _
        // Predicated region
        $region25: #{tpu_custom_call.1} parent=11 // pred_check
          %p293 = pneg %p133
        $region26: #{tpu_custom_call.1} parent=11 // pred_check_branch
          %295 = sbr.rel (%p293) target = $region28
        $region27: #{tpu_custom_call.1} parent=11 // pred_region
          _
        $region28: #{tpu_custom_call.1} parent=11 // pred_fallthru
          _
        // Predicated region
        $region29: #{tpu_custom_call.1} parent=11 // pred_check
          %p296 = pneg %p154
        $region30: #{tpu_custom_call.1} parent=11 // pred_check_branch
          %298 = sbr.rel (%p296) target = $region32
        $region31: #{tpu_custom_call.1} parent=11 // pred_region
          _
        $region32: #{tpu_custom_call.1} parent=11 // pred_fallthru
          _
        // Predicated region
        $region33: #{tpu_custom_call.1} parent=11 // pred_check
          %p299 = pneg %p175
        $region34: #{tpu_custom_call.1} parent=11 // pred_check_branch
          %301 = sbr.rel (%p299) target = $region36
        $region35: #{tpu_custom_call.1} parent=11 // pred_region
          _
        $region36: #{tpu_custom_call.1} parent=11 // pred_fallthru
          _
        // Predicated region
        $region37: #{tpu_custom_call.1} parent=11 // pred_check
          %p302 = pneg %p196
        $region38: #{tpu_custom_call.1} parent=11 // pred_check_branch
          %304 = sbr.rel (%p302) target = $region40
        $region39: #{tpu_custom_call.1} parent=11 // pred_region
          _
        $region40: #{tpu_custom_call.1} parent=11 // pred_fallthru
          _
        // Predicated region
        $region41: #{tpu_custom_call.1} parent=11 // pred_check
          %p305 = pneg %p217
        $region42: #{tpu_custom_call.1} parent=11 // pred_check_branch
          %307 = sbr.rel (%p305) target = $region44
        $region43: #{tpu_custom_call.1} parent=11 // pred_region
          _
        $region44: #{tpu_custom_call.1} parent=11 // pred_fallthru
          _
      $region12: #{tpu_custom_call.1} parent=5 // pred_fallthru
        _
      %p308 = scmp.lt.s32.totalorder %s23, 2
      // Predicated region
      $region45: #{tpu_custom_call.1} parent=5 // pred_check
        %p309 = pneg %p308
      $region46: #{tpu_custom_call.1} parent=5 // pred_check_branch
        %311 = sbr.rel (%p309) target = $region48
      $region47: #{tpu_custom_call.1} parent=5 // pred_region
        // Predicated region
        $region49: #{tpu_custom_call.1} parent=47 // pred_check
          %p312 = pneg %p43
        $region50: #{tpu_custom_call.1} parent=47 // pred_check_branch
          %314 = sbr.rel (%p312) target = $region52
        $region51: #{tpu_custom_call.1} parent=47 // pred_region
          %p315 = scmp.lt.s32.totalorder %s23, 1
          %s316 = scalar_select %p315, %s23, 1
          %s317 = smul.addr %s316, 8
          %s318 = scalar_lea.vmem %s0, %s317
        $region52: #{tpu_custom_call.1} parent=47 // pred_fallthru
          _
      $region48: #{tpu_custom_call.1} parent=5 // pred_fallthru
        _
      %p319 = scmp.le.s32.totalorder 1, %s23
      %p320 = scmp.lt.s32.totalorder %s23, 3
      %p321 = pnand %p319, %p320
      %p322 = pneg %p321
      // Predicated region
      $region53: #{tpu_custom_call.1} parent=5 // pred_check
        _
      $region54: #{tpu_custom_call.1} parent=5 // pred_check_branch
        %324 = sbr.rel (%p321) target = $region56
      $region55: #{tpu_custom_call.1} parent=5 // pred_region
        %s325 = ssub.s32 %s23, 1
        %p326 = scmp.lt.s32.totalorder %s28, 1
        %s327 = scalar_select %p326, %s28, 1
        %s328 = smul.addr %s327, 8
        %s329 = scalar_lea.vmem %s0, %s328
        %p330 = pneg %p49
        %p331 = pneg %p46
        %p332 = pneg %p70
        %p333 = pneg %p67
        %p334 = pneg %p91
        %p335 = pneg %p88
        %p336 = pneg %p112
        %p337 = pneg %p109
        %p338 = pneg %p133
        %p339 = pneg %p130
        %p340 = pneg %p154
        %p341 = pneg %p151
        %p342 = pneg %p175
        %p343 = pneg %p172
        %p344 = pneg %p196
        %p345 = pneg %p193
        %p346 = pneg %p217
        %p347 = pneg %p214
        %p348 = pneg %p243
        %p349 = pneg %p240
        %s350 = sand.u32 %s230, 1
        %s351 = scalar_lea.sflag [#allocation3], %s350
        %s352 = sand.u32 %s230, 1
        %s353 = smul.addr %s352, 16
        %s354 = scalar_lea.vmem [#allocation2], %s353
        %p355 = pneg %p269
        %p356 = pneg %p266
        %s357 = sand.u32 %s256, 1
        %s358 = scalar_lea.sflag [#allocation5], %s357
        %s359 = sand.u32 %s256, 1
        %s360 = smul.addr %s359, 16
        %s361 = scalar_lea.vmem [#allocation4], %s360
        %p362 = scmp.lt.s32.totalorder %s28, 1
        %s363 = scalar_select %p362, %s28, 1
        %s364 = smul.addr %s363, 8
        %s365 = scalar_lea.vmem %s0, %s364
        %v366 = vld [vmem:[%s365] sm:$0xff]
        %v367 = vld [vmem:[%s1] sm:$0xff]
        %v368 = vld [vmem:[%s2] sm:$0xff]
        %370 = vset.pattern.permute.xlu0 0
        %371 = vperm.xlu0 %370, %v368
        %v372 = vpop.permute.xlu0 %371
        %vm374 = vcmask 64512
        %v376 = vsel %vm374, %v367, 0
        %378 = vmatprep.subr.mxu0 0.0
        %379 = vmatpush1.msra.mxu0 %v366
        %380 = vmatprep.subr.mxu0 0.0
        %381 = vmatpush1.msra.mxu0 0.0
        %382 = vmatprep.subr.mxu0 0.0
        %383 = vmatpush1.msra.mxu0 0.0
        %384 = vmatprep.subr.mxu0 0.0
        %385 = vmatpush1.msra.mxu0 0.0
        %386 = vmatprep.subr.mxu0 0.0
        %387 = vmatpush1.msra.mxu0 0.0
        %388 = vmatprep.subr.mxu0 0.0
        %389 = vmatpush1.msra.mxu0 0.0
        %390 = vmatprep.subr.mxu0 0.0
        %391 = vmatpush1.msra.mxu0 0.0
        %392 = vmatprep.subr.mxu0 0.0
        %393 = vmatpush1.msra.mxu0 0.0
        %394 = vmatprep.subr.mxu0 0.0
        %395 = vmatpush1.msra.mxu0 0.0
        %396 = vmatprep.subr.mxu0 0.0
        %397 = vmatpush1.msra.mxu0 0.0
        %398 = vmatprep.subr.mxu0 0.0
        %399 = vmatpush1.msra.mxu0 0.0
        %400 = vmatprep.subr.mxu0 0.0
        %401 = vmatpush1.msra.mxu0 0.0
        %402 = vmatprep.subr.mxu0 0.0
        %403 = vmatpush1.msra.mxu0 0.0
        %404 = vmatprep.subr.mxu0 0.0
        %405 = vmatpush1.msra.mxu0 0.0
        %406 = vmatprep.subr.mxu0 0.0
        %407 = vmatpush1.msra.mxu0 0.0
        %408 = vmatprep.subr.mxu0 0.0
        %409 = vmatpush1.msra.mxu0 0.0
        %410 = vmatprep.subr.mxu0 0.0
        %411 = vmatpush1.msra.mxu0 0.0
        %412 = vmatprep.subr.mxu0 0.0
        %413 = vmatpush1.msra.mxu0 0.0
        %414 = vmatprep.subr.mxu0 0.0
        %415 = vmatpush1.msra.mxu0 0.0
        %416 = vmatprep.subr.mxu0 0.0
        %417 = vmatpush1.msra.mxu0 0.0
        %418 = vmatprep.subr.mxu0 0.0
        %419 = vmatpush1.msra.mxu0 0.0
        %420 = vmatprep.subr.mxu0 0.0
        %421 = vmatpush1.msra.mxu0 0.0
        %422 = vmatprep.subr.mxu0 0.0
        %423 = vmatpush1.msra.mxu0 0.0
        %424 = vmatprep.subr.mxu0 0.0
        %425 = vmatpush1.msra.mxu0 0.0
        %426 = vmatprep.subr.mxu0 0.0
        %427 = vmatpush1.msra.mxu0 0.0
        %428 = vmatprep.subr.mxu0 0.0
        %429 = vmatpush1.msra.mxu0 0.0
        %430 = vmatprep.subr.mxu0 0.0
        %431 = vmatpush1.msra.mxu0 0.0
        %432 = vmatprep.subr.mxu0 0.0
        %433 = vmatpush1.msra.mxu0 0.0
        %434 = vmatprep.subr.mxu0 0.0
        %435 = vmatpush1.msra.mxu0 0.0
        %436 = vmatprep.subr.mxu0 0.0
        %437 = vmatpush1.msra.mxu0 0.0
        %438 = vmatprep.subr.mxu0 0.0
        %439 = vmatpush1.msra.mxu0 0.0
        %440 = vmatprep.subr.mxu0 0.0
        %441 = vmatpush1.msra.mxu0 0.0
        %442 = vmatprep.mubr.f32.mxu0 0.0
        %443 = vmatmul.mubr.f32.gmra.mrb[0].mxu0 %v376
        %v444 = vpop.f32.mrb[0].mxu0
        %v445 = vadd.f32 %v372, %v444
        %v446 = vpop.f32.mrb[0].mxu0
        %447 = vdwg.mxu0
        %v448 = vmax.f32 %v445, 0.0
        %v449 = vld [vmem:[%s3] sm:$0xff]
        %v450 = vld [vmem:[%s3 + $0x8] sm:$0xff]
        %v451 = vld [vmem:[%s4] sm:$0xff]
        %v452 = vld [vmem:[%s4 + $0x8] sm:$0xff]
        %454 = vset.pattern.permute.xlu0 0
        %455 = vperm.xlu0 %454, %v451
        %v456 = vpop.permute.xlu0 %455
        %459 = vset.pattern.permute.xlu0 0
        %460 = vperm.xlu0 %459, %v452
        %v461 = vpop.permute.xlu0 %460
        %v464 = vsel %vm374, %v449, 0
        %v467 = vsel %vm374, %v450, 0
        %469 = vmatprep.subr.mxu0 0.0
        %470 = vmatpush1.msra.mxu0 %v448
        %471 = vmatprep.subr.mxu0 0.0
        %472 = vmatpush1.msra.mxu0 0.0
        %473 = vmatprep.subr.mxu0 0.0
        %474 = vmatpush1.msra.mxu0 0.0
        %475 = vmatprep.subr.mxu0 0.0
        %476 = vmatpush1.msra.mxu0 0.0
        %477 = vmatprep.subr.mxu0 0.0
        %478 = vmatpush1.msra.mxu0 0.0
        %479 = vmatprep.subr.mxu0 0.0
        %480 = vmatpush1.msra.mxu0 0.0
        %481 = vmatprep.subr.mxu0 0.0
        %482 = vmatpush1.msra.mxu0 0.0
        %483 = vmatprep.subr.mxu0 0.0
        %484 = vmatpush1.msra.mxu0 0.0
        %485 = vmatprep.subr.mxu0 0.0
        %486 = vmatpush1.msra.mxu0 0.0
        %487 = vmatprep.subr.mxu0 0.0
        %488 = vmatpush1.msra.mxu0 0.0
        %489 = vmatprep.subr.mxu0 0.0
        %490 = vmatpush1.msra.mxu0 0.0
        %491 = vmatprep.subr.mxu0 0.0
        %492 = vmatpush1.msra.mxu0 0.0
        %493 = vmatprep.subr.mxu0 0.0
        %494 = vmatpush1.msra.mxu0 0.0
        %495 = vmatprep.subr.mxu0 0.0
        %496 = vmatpush1.msra.mxu0 0.0
        %497 = vmatprep.subr.mxu0 0.0
        %498 = vmatpush1.msra.mxu0 0.0
        %499 = vmatprep.subr.mxu0 0.0
        %500 = vmatpush1.msra.mxu0 0.0
        %501 = vmatprep.subr.mxu0 0.0
        %502 = vmatpush1.msra.mxu0 0.0
        %503 = vmatprep.subr.mxu0 0.0
        %504 = vmatpush1.msra.mxu0 0.0
        %505 = vmatprep.subr.mxu0 0.0
        %506 = vmatpush1.msra.mxu0 0.0
        %507 = vmatprep.subr.mxu0 0.0
        %508 = vmatpush1.msra.mxu0 0.0
        %509 = vmatprep.subr.mxu0 0.0
        %510 = vmatpush1.msra.mxu0 0.0
        %511 = vmatprep.subr.mxu0 0.0
        %512 = vmatpush1.msra.mxu0 0.0
        %513 = vmatprep.subr.mxu0 0.0
        %514 = vmatpush1.msra.mxu0 0.0
        %515 = vmatprep.subr.mxu0 0.0
        %516 = vmatpush1.msra.mxu0 0.0
        %517 = vmatprep.subr.mxu0 0.0
        %518 = vmatpush1.msra.mxu0 0.0
        %519 = vmatprep.subr.mxu0 0.0
        %520 = vmatpush1.msra.mxu0 0.0
        %521 = vmatprep.subr.mxu0 0.0
        %522 = vmatpush1.msra.mxu0 0.0
        %523 = vmatprep.subr.mxu0 0.0
        %524 = vmatpush1.msra.mxu0 0.0
        %525 = vmatprep.subr.mxu0 0.0
        %526 = vmatpush1.msra.mxu0 0.0
        %527 = vmatprep.subr.mxu0 0.0
        %528 = vmatpush1.msra.mxu0 0.0
        %529 = vmatprep.subr.mxu0 0.0
        %530 = vmatpush1.msra.mxu0 0.0
        %531 = vmatprep.subr.mxu0 0.0
        %532 = vmatpush1.msra.mxu0 0.0
        %533 = vmatprep.mubr.f32.mxu0 0.0
        %534 = vmatmul.mubr.f32.gmra.mrb[0].mxu0 %v464
        %v535 = vpop.f32.mrb[0].mxu0
        %v536 = vadd.f32 %v456, %v535
        %v537 = vpop.f32.mrb[0].mxu0
        %538 = vmatprep.mubr.f32.mxu0 0.0
        %539 = vmatmul.mubr.f32.gmra.mrb[0].mxu0 %v467
        %v540 = vpop.f32.mrb[0].mxu0
        %v541 = vadd.f32 %v461, %v540
        %v542 = vpop.f32.mrb[0].mxu0
        %543 = vdwg.mxu0
        %v544 = vld [vmem:[%s5] sm:$0xff]
        %v545 = vld [vmem:[%s5 + $0x8] sm:$0xff]
        %v546 = vld [vmem:[%s5 + $0x10] sm:$0xff]
        %v547 = vld [vmem:[%s5 + $0x18] sm:$0xff]
        %v548 = vld [vmem:[%s6] sm:$0x1]
        %v550 = vlaneseq
        %v551 = vshrl.u32 %v550, 7
        %v552 = vsub.s32 0, %v551
        %v553 = vrot.slane %v548, %v552
        %vm555 = vcmask 261120
        %v557 = vsel %vm555, %v536, 0
        %v560 = vsel %vm555, %v541, 0
        %562 = vmatprep.subr.mxu0 0.0
        %563 = vmatpush1.msra.mxu0 %v544
        %564 = vmatprep.subr.mxu0 0.0
        %565 = vmatpush1.msra.mxu0 %v545
        %566 = vmatprep.subr.mxu0 0.0
        %567 = vmatpush1.msra.mxu0 %v546
        %568 = vmatprep.subr.mxu0 0.0
        %569 = vmatpush1.msra.mxu0 %v547
        %570 = vmatprep.subr.mxu0 0.0
        %571 = vmatpush1.msra.mxu0 0.0
        %572 = vmatprep.subr.mxu0 0.0
        %573 = vmatpush1.msra.mxu0 0.0
        %574 = vmatprep.subr.mxu0 0.0
        %575 = vmatpush1.msra.mxu0 0.0
        %576 = vmatprep.subr.mxu0 0.0
        %577 = vmatpush1.msra.mxu0 0.0
        %578 = vmatprep.subr.mxu0 0.0
        %579 = vmatpush1.msra.mxu0 0.0
        %580 = vmatprep.subr.mxu0 0.0
        %581 = vmatpush1.msra.mxu0 0.0
        %582 = vmatprep.subr.mxu0 0.0
        %583 = vmatpush1.msra.mxu0 0.0
        %584 = vmatprep.subr.mxu0 0.0
        %585 = vmatpush1.msra.mxu0 0.0
        %586 = vmatprep.subr.mxu0 0.0
        %587 = vmatpush1.msra.mxu0 0.0
        %588 = vmatprep.subr.mxu0 0.0
        %589 = vmatpush1.msra.mxu0 0.0
        %590 = vmatprep.subr.mxu0 0.0
        %591 = vmatpush1.msra.mxu0 0.0
        %592 = vmatprep.subr.mxu0 0.0
        %593 = vmatpush1.msra.mxu0 0.0
        %594 = vmatprep.subr.mxu0 0.0
        %595 = vmatpush1.msra.mxu0 0.0
        %596 = vmatprep.subr.mxu0 0.0
        %597 = vmatpush1.msra.mxu0 0.0
        %598 = vmatprep.subr.mxu0 0.0
        %599 = vmatpush1.msra.mxu0 0.0
        %600 = vmatprep.subr.mxu0 0.0
        %601 = vmatpush1.msra.mxu0 0.0
        %602 = vmatprep.subr.mxu0 0.0
        %603 = vmatpush1.msra.mxu0 0.0
        %604 = vmatprep.subr.mxu0 0.0
        %605 = vmatpush1.msra.mxu0 0.0
        %606 = vmatprep.subr.mxu0 0.0
        %607 = vmatpush1.msra.mxu0 0.0
        %608 = vmatprep.subr.mxu0 0.0
        %609 = vmatpush1.msra.mxu0 0.0
        %610 = vmatprep.subr.mxu0 0.0
        %611 = vmatpush1.msra.mxu0 0.0
        %612 = vmatprep.subr.mxu0 0.0
        %613 = vmatpush1.msra.mxu0 0.0
        %614 = vmatprep.subr.mxu0 0.0
        %615 = vmatpush1.msra.mxu0 0.0
        %616 = vmatprep.subr.mxu0 0.0
        %617 = vmatpush1.msra.mxu0 0.0
        %618 = vmatprep.subr.mxu0 0.0
        %619 = vmatpush1.msra.mxu0 0.0
        %620 = vmatprep.subr.mxu0 0.0
        %621 = vmatpush1.msra.mxu0 0.0
        %622 = vmatprep.subr.mxu0 0.0
        %623 = vmatpush1.msra.mxu0 0.0
        %624 = vmatprep.subr.mxu0 0.0
        %625 = vmatpush1.msra.mxu0 0.0
        %626 = vmatprep.mubr.f32.mxu0 0.0
        %627 = vmatmul.mubr.f32.gmra.mrb[0].mxu0 %v557
        %v628 = vpop.f32.mrb[0].mxu0
        %v629 = vadd.f32 %v553, %v628
        %v630 = vpop.f32.mrb[0].mxu0
        %631 = vmatprep.mubr.f32.mxu0 0.0
        %632 = vmatmul.mubr.f32.gmra.mrb[0].mxu0 %v560
        %v633 = vpop.f32.mrb[0].mxu0
        %v634 = vadd.f32 %v553, %v633
        %v635 = vpop.f32.mrb[0].mxu0
        %636 = vdwg.mxu0
        %v637 = vmax.f32 %v629, 0.0
        %v638 = vmax.f32 %v634, 0.0
        %v639 = vld [vmem:[%s7] sm:$0xff]
        %v640 = vld [vmem:[%s7 + $0x8] sm:$0xff]
        %v641 = vld [vmem:[%s7 + $0x10] sm:$0xff]
        %v642 = vld [vmem:[%s7 + $0x18] sm:$0xff]
        %v643 = vld [vmem:[%s8] sm:$0x1]
        %v645 = vlaneseq
        %v646 = vshrl.u32 %v645, 7
        %v647 = vsub.s32 0, %v646
        %v648 = vrot.slane %v643, %v647
        %v651 = vsel %vm555, %v637, 0
        %v654 = vsel %vm555, %v638, 0
        %656 = vmatprep.subr.mxu0 0.0
        %657 = vmatpush1.msra.mxu0 %v639
        %658 = vmatprep.subr.mxu0 0.0
        %659 = vmatpush1.msra.mxu0 %v640
        %660 = vmatprep.subr.mxu0 0.0
        %661 = vmatpush1.msra.mxu0 %v641
        %662 = vmatprep.subr.mxu0 0.0
        %663 = vmatpush1.msra.mxu0 %v642
        %664 = vmatprep.subr.mxu0 0.0
        %665 = vmatpush1.msra.mxu0 0.0
        %666 = vmatprep.subr.mxu0 0.0
        %667 = vmatpush1.msra.mxu0 0.0
        %668 = vmatprep.subr.mxu0 0.0
        %669 = vmatpush1.msra.mxu0 0.0
        %670 = vmatprep.subr.mxu0 0.0
        %671 = vmatpush1.msra.mxu0 0.0
        %672 = vmatprep.subr.mxu0 0.0
        %673 = vmatpush1.msra.mxu0 0.0
        %674 = vmatprep.subr.mxu0 0.0
        %675 = vmatpush1.msra.mxu0 0.0
        %676 = vmatprep.subr.mxu0 0.0
        %677 = vmatpush1.msra.mxu0 0.0
        %678 = vmatprep.subr.mxu0 0.0
        %679 = vmatpush1.msra.mxu0 0.0
        %680 = vmatprep.subr.mxu0 0.0
        %681 = vmatpush1.msra.mxu0 0.0
        %682 = vmatprep.subr.mxu0 0.0
        %683 = vmatpush1.msra.mxu0 0.0
        %684 = vmatprep.subr.mxu0 0.0
        %685 = vmatpush1.msra.mxu0 0.0
        %686 = vmatprep.subr.mxu0 0.0
        %687 = vmatpush1.msra.mxu0 0.0
        %688 = vmatprep.subr.mxu0 0.0
        %689 = vmatpush1.msra.mxu0 0.0
        %690 = vmatprep.subr.mxu0 0.0
        %691 = vmatpush1.msra.mxu0 0.0
        %692 = vmatprep.subr.mxu0 0.0
        %693 = vmatpush1.msra.mxu0 0.0
        %694 = vmatprep.subr.mxu0 0.0
        %695 = vmatpush1.msra.mxu0 0.0
        %696 = vmatprep.subr.mxu0 0.0
        %697 = vmatpush1.msra.mxu0 0.0
        %698 = vmatprep.subr.mxu0 0.0
        %699 = vmatpush1.msra.mxu0 0.0
        %700 = vmatprep.subr.mxu0 0.0
        %701 = vmatpush1.msra.mxu0 0.0
        %702 = vmatprep.subr.mxu0 0.0
        %703 = vmatpush1.msra.mxu0 0.0
        %704 = vmatprep.subr.mxu0 0.0
        %705 = vmatpush1.msra.mxu0 0.0
        %706 = vmatprep.subr.mxu0 0.0
        %707 = vmatpush1.msra.mxu0 0.0
        %708 = vmatprep.subr.mxu0 0.0
        %709 = vmatpush1.msra.mxu0 0.0
        %710 = vmatprep.subr.mxu0 0.0
        %711 = vmatpush1.msra.mxu0 0.0
        %712 = vmatprep.subr.mxu0 0.0
        %713 = vmatpush1.msra.mxu0 0.0
        %714 = vmatprep.subr.mxu0 0.0
        %715 = vmatpush1.msra.mxu0 0.0
        %716 = vmatprep.subr.mxu0 0.0
        %717 = vmatpush1.msra.mxu0 0.0
        %718 = vmatprep.subr.mxu0 0.0
        %719 = vmatpush1.msra.mxu0 0.0
        %720 = vmatprep.mubr.f32.mxu0 0.0
        %721 = vmatmul.mubr.f32.gmra.mrb[0].mxu0 %v651
        %v722 = vpop.f32.mrb[0].mxu0
        %v723 = vadd.f32 %v648, %v722
        %v724 = vpop.f32.mrb[0].mxu0
        %725 = vmatprep.mubr.f32.mxu0 0.0
        %726 = vmatmul.mubr.f32.gmra.mrb[0].mxu0 %v654
        %v727 = vpop.f32.mrb[0].mxu0
        %v728 = vadd.f32 %v648, %v727
        %v729 = vpop.f32.mrb[0].mxu0
        %730 = vdwg.mxu0
        %vm731 = vcmask 130048
        %v733 = vsel %vm731, %v723, 0
        %v736 = vsel %vm731, %v728, 0
        %738 = vmatprep.subr.mxu0 0.0
        %739 = vmatpush1.xpose.msra.mxu0 %v733
        %740 = vmatprep.subr.mxu0 0.0
        %741 = vmatpush1.xpose.msra.mxu0 %v736
        %742 = vmatprep.subr.mxu0 0.0
        %743 = vmatpush1.xpose.msra.mxu0 0.0
        %744 = vmatprep.subr.mxu0 0.0
        %745 = vmatpush1.xpose.msra.mxu0 0.0
        %746 = vmatprep.subr.mxu0 0.0
        %747 = vmatpush1.xpose.msra.mxu0 0.0
        %748 = vmatprep.subr.mxu0 0.0
        %749 = vmatpush1.xpose.msra.mxu0 0.0
        %750 = vmatprep.subr.mxu0 0.0
        %751 = vmatpush1.xpose.msra.mxu0 0.0
        %752 = vmatprep.subr.mxu0 0.0
        %753 = vmatpush1.xpose.msra.mxu0 0.0
        %754 = vmatprep.subr.mxu0 0.0
        %755 = vmatpush1.xpose.msra.mxu0 0.0
        %756 = vmatprep.subr.mxu0 0.0
        %757 = vmatpush1.xpose.msra.mxu0 0.0
        %758 = vmatprep.subr.mxu0 0.0
        %759 = vmatpush1.xpose.msra.mxu0 0.0
        %760 = vmatprep.subr.mxu0 0.0
        %761 = vmatpush1.xpose.msra.mxu0 0.0
        %762 = vmatprep.subr.mxu0 0.0
        %763 = vmatpush1.xpose.msra.mxu0 0.0
        %764 = vmatprep.subr.mxu0 0.0
        %765 = vmatpush1.xpose.msra.mxu0 0.0
        %766 = vmatprep.subr.mxu0 0.0
        %767 = vmatpush1.xpose.msra.mxu0 0.0
        %768 = vmatprep.subr.mxu0 0.0
        %769 = vmatpush1.xpose.msra.mxu0 0.0
        %770 = vmatprep.subr.mxu0 0.0
        %771 = vmatpush1.xpose.msra.mxu0 0.0
        %772 = vmatprep.subr.mxu0 0.0
        %773 = vmatpush1.xpose.msra.mxu0 0.0
        %774 = vmatprep.subr.mxu0 0.0
        %775 = vmatpush1.xpose.msra.mxu0 0.0
        %776 = vmatprep.subr.mxu0 0.0
        %777 = vmatpush1.xpose.msra.mxu0 0.0
        %778 = vmatprep.subr.mxu0 0.0
        %779 = vmatpush1.xpose.msra.mxu0 0.0
        %780 = vmatprep.subr.mxu0 0.0
        %781 = vmatpush1.xpose.msra.mxu0 0.0
        %782 = vmatprep.subr.mxu0 0.0
        %783 = vmatpush1.xpose.msra.mxu0 0.0
        %784 = vmatprep.subr.mxu0 0.0
        %785 = vmatpush1.xpose.msra.mxu0 0.0
        %786 = vmatprep.subr.mxu0 0.0
        %787 = vmatpush1.xpose.msra.mxu0 0.0
        %788 = vmatprep.subr.mxu0 0.0
        %789 = vmatpush1.xpose.msra.mxu0 0.0
        %790 = vmatprep.subr.mxu0 0.0
        %791 = vmatpush1.xpose.msra.mxu0 0.0
        %792 = vmatprep.subr.mxu0 0.0
        %793 = vmatpush1.xpose.msra.mxu0 0.0
        %794 = vmatprep.subr.mxu0 0.0
        %795 = vmatpush1.xpose.msra.mxu0 0.0
        %796 = vmatprep.subr.mxu0 0.0
        %797 = vmatpush1.xpose.msra.mxu0 0.0
        %798 = vmatprep.subr.mxu0 0.0
        %799 = vmatpush1.xpose.msra.mxu0 0.0
        %800 = vmatprep.subr.mxu0 0.0
        %801 = vmatpush1.xpose.msra.mxu0 0.0
        %802 = vmatprep.mubr.f32.mxu0 0.0
        %803 = vmatmul.mubr.f32.gmra.mrb[0].mxu0 %v733
        %v804 = vpop.f32.mrb[0].mxu0
        %v805 = vadd.f32 0.0, %v804
        %v806 = vpop.f32.mrb[0].mxu0
        %807 = vmatprep.mubr.f32.mxu0 0.0
        %808 = vmatmul.mubr.f32.gmra.mrb[0].mxu0 %v736
        %v809 = vpop.f32.mrb[0].mxu0
        %v810 = vadd.f32 0.0, %v809
        %v811 = vpop.f32.mrb[0].mxu0
        %812 = vdwg.mxu0
        %813 = vst.msk [vmem:[%s354] sm:$0xff] %vm731, %v723
        %814 = vst.msk [vmem:[%s354 + $0x8] sm:$0xff] %vm731, %v728
        %815 = vst.msk [vmem:[%s361] sm:$0xff] %vm731, %v805
        %816 = vst.msk [vmem:[%s361 + $0x8] sm:$0xff] %vm731, %v810
        %s817 = sand.u32 %s230, 1
        %s818 = scalar_lea.sflag [#allocation3], %s817
        %s819 = sand.u32 %s230, 1
        %s820 = smul.addr %s819, 16
        %s821 = scalar_lea.vmem [#allocation2], %s820
        %s822 = sand.u32 %s256, 1
        %s823 = scalar_lea.sflag [#allocation5], %s822
        %s824 = sand.u32 %s256, 1
        %s825 = smul.addr %s824, 16
        %s826 = scalar_lea.vmem [#allocation4], %s825
        // Predicated region
        $region57: #{tpu_custom_call.1} parent=55 // pred_check
          %p827 = pneg %p240
        $region58: #{tpu_custom_call.1} parent=55 // pred_check_branch
          %829 = sbr.rel (%p827) target = $region60
        $region59: #{tpu_custom_call.1} parent=55 // pred_region
          %s831 = ssub.s32 256, 256
          %832 = vsyncadd %s818, %s831
          %s833 = smul.addr %s28, 2
          %s834 = smul.addr %s833, 128
          %s835 = scalar_lea.hbm %s9, %s834
          %s836 = sshll.u32 %s821, 4
          %s837 = int_to_ptr.vmem [resolvable:$true] %s836
          %842 = dma.vmem_to_hbm [thread:$0]  %s837, 256, %s835, %s818, 128, 128, 8
        $region60: #{tpu_custom_call.1} parent=55 // pred_fallthru
          _
        // Predicated region
        $region61: #{tpu_custom_call.1} parent=55 // pred_check
          %p843 = pneg %p266
        $region62: #{tpu_custom_call.1} parent=55 // pred_check_branch
          %845 = sbr.rel (%p843) target = $region64
        $region63: #{tpu_custom_call.1} parent=55 // pred_region
          %s847 = ssub.s32 256, 256
          %848 = vsyncadd %s823, %s847
          %s849 = smul.addr %s28, 2
          %s850 = smul.addr %s849, 128
          %s851 = scalar_lea.hbm %s10, %s850
          %s852 = sshll.u32 %s826, 4
          %s853 = int_to_ptr.vmem [resolvable:$true] %s852
          %858 = dma.vmem_to_hbm [thread:$0]  %s853, 256, %s851, %s823, 128, 128, 8
        $region64: #{tpu_custom_call.1} parent=55 // pred_fallthru
          _
      $region56: #{tpu_custom_call.1} parent=5 // pred_fallthru
        _
      %p859 = scmp.le.s32.totalorder 2, %s23
      // Predicated region
      $region65: #{tpu_custom_call.1} parent=5 // pred_check
        %p860 = pneg %p859
      $region66: #{tpu_custom_call.1} parent=5 // pred_check_branch
        %862 = sbr.rel (%p860) target = $region68
      $region67: #{tpu_custom_call.1} parent=5 // pred_region
        %s863 = ssub.s32 %s23, 2
        // Predicated region
        $region69: #{tpu_custom_call.1} parent=67 // pred_check
          %p864 = pneg %p246
        $region70: #{tpu_custom_call.1} parent=67 // pred_check_branch
          %866 = sbr.rel (%p864) target = $region72
        $region71: #{tpu_custom_call.1} parent=67 // pred_region
          %s867 = sand.u32 %s231, 1
          %s868 = scalar_lea.sflag [#allocation3], %s867
          %s869 = sand.u32 %s231, 1
          %s870 = smul.addr %s869, 16
          %s871 = scalar_lea.vmem [#allocation2], %s870
          %872 = dma.done %s868, 256
        $region72: #{tpu_custom_call.1} parent=67 // pred_fallthru
          _
        // Predicated region
        $region73: #{tpu_custom_call.1} parent=67 // pred_check
          %p873 = pneg %p272
        $region74: #{tpu_custom_call.1} parent=67 // pred_check_branch
          %875 = sbr.rel (%p873) target = $region76
        $region75: #{tpu_custom_call.1} parent=67 // pred_region
          %s876 = sand.u32 %s257, 1
          %s877 = scalar_lea.sflag [#allocation5], %s876
          %s878 = sand.u32 %s257, 1
          %s879 = smul.addr %s878, 16
          %s880 = scalar_lea.vmem [#allocation4], %s879
          %881 = dma.done %s877, 256
        $region76: #{tpu_custom_call.1} parent=67 // pred_fallthru
          _
      $region68: #{tpu_custom_call.1} parent=5 // pred_fallthru
        _
    $region6: #{tpu_custom_call.1} parent=1 // loop_footer
      %s27 = sadd.s32 1, %s23
    $region7: #{tpu_custom_call.1} parent=1 // loop_footer_branch
      %22 = sbr.rel target = $region3
    $region8: #{tpu_custom_call.1} parent=1 // loop_exit
      _
    %882 = vsyncpa [#allocation3], 1
    %s883 = scalar_lea.sflag [#allocation3], 1
    %884 = vsyncpa %s883, 1
    %885 = vsyncpa [#allocation5], 1
    %s886 = scalar_lea.sflag [#allocation5], 1
    %887 = vsyncpa %s886, 1

</llo_original>
